<compile_context>
chip_gen: v6e
topology: v6e:2x2x1
jax: 0.10.0
libtpu: 0.0.40
codegen_flags: <defaults>
</compile_context>

<pallas_src>
import functools

import jax
import jax.numpy as jnp
from jax.experimental import pallas as pl
from jax.experimental.pallas import tpu as pltpu


def _round_up(v, m):
    return ((v + m - 1) // m) * m


def _cdiv(a, b):
    return (a + b - 1) // b


def _choose_tile(n, tile_max=1024):
    """Row-tile size: >=2 grid steps when possible, 16-row aligned (bf16)."""
    if n <= 16:
        return n                       # single full-extent block
    steps = max(2, _cdiv(n, tile_max))
    tile = _round_up(_cdiv(n, steps), 16)
    return min(tile, tile_max)


def _transition_kernel(
    x_ref, h_ref,
    wxg_ref, whg_ref, bg_ref,     # fused gate weights (r|z|n aligned slabs)
    wo_ref, bo_ref,               # output projection
    y_ref, h_new_ref,
    *, hidden, hidden_pad,
):
    H, Hp = hidden, hidden_pad
    f32 = jnp.float32
    bf16 = jnp.bfloat16

    x = x_ref[...]                                  # bf16 [T, D]
    h = h_ref[...]                                  # f32  [T, H]
    hb = h.astype(bf16)

    # Two MXU matmuls: bf16 operands, f32 accumulation, 3*Hp lane-dense out.
    gx = jnp.dot(x, wxg_ref[...], preferred_element_type=f32)
    gh = jnp.dot(hb, whg_ref[...], preferred_element_type=f32)
    pre = gx + bg_ref[...]

    # Gate math in f32 on VPU/EUP; every slice starts on a 128-lane boundary
    # (or at lane 0 of a slab), so no cross-lane movement.
    r = jax.nn.sigmoid(pre[:, 0:Hp] + gh[:, 0:Hp])
    z = jax.nn.sigmoid(pre[:, Hp:2 * Hp] + gh[:, Hp:2 * Hp])
    n = jnp.tanh(pre[:, 2 * Hp:3 * Hp] + r * gh[:, 2 * Hp:3 * Hp])

    zl = z[:, :H]                                   # lane-0-aligned slice
    h_new = (1.0 - zl) * n[:, :H] + zl * h
    h_new_ref[...] = h_new

    y = jnp.dot(h_new.astype(bf16), wo_ref[...], preferred_element_type=f32)
    y_ref[...] = (y + bo_ref[...]).astype(y_ref.dtype)


@jax.jit
def _forward(x, mem, params):
    w_xg, w_hg, b_g, w_out, b_out = params
    B, S, D = x.shape
    H = mem.shape[-1]
    Hp = w_hg.shape[-1] // 3
    N = B * S
    tile_n = _choose_tile(N)
    grid = (_cdiv(N, tile_n),)

    # Cast/reshape inside the same jit as the pallas_call (no extra HBM pass
    # for padding/slicing; bf16 x halves its read traffic).
    xf = x.reshape(N, D).astype(jnp.bfloat16)
    hf = mem.reshape(N, H).astype(jnp.float32)

    def row_spec(cols):
        return pl.BlockSpec((tile_n, cols), lambda i: (i, 0))

    def resident(shape):
        return pl.BlockSpec(shape, lambda i: (0, 0))

    kernel = functools.partial(_transition_kernel, hidden=H, hidden_pad=Hp)

    flops = 2 * N * (D * 3 * Hp + H * 3 * Hp + H * D)
    bytes_accessed = (
        N * (2 * D + 4 * H)           # x (bf16) + mem (f32) reads
        + N * (2 * D + 4 * H)         # y (bf16) + h_new (f32) writes
        + (w_xg.size + w_hg.size + w_out.size) * 2
        + (b_g.size + b_out.size) * 4
    )

    y, h_new = pl.pallas_call(
        kernel,
        out_shape=(
            jax.ShapeDtypeStruct((N, D), jnp.bfloat16),
            jax.ShapeDtypeStruct((N, H), jnp.float32),
        ),
        grid=grid,
        in_specs=[
            row_spec(D),                       # x tiles (pipelined)
            row_spec(H),                       # mem tiles (pipelined)
            resident((D, 3 * Hp)),             # W_xg (bf16, VMEM-resident)
            resident((H, 3 * Hp)),             # W_hg (bf16, VMEM-resident)
            resident((1, 3 * Hp)),             # fused gate bias
            resident((H, D)),                  # W_out (bf16)
            resident((1, D)),                  # b_out
        ],
        out_specs=(row_spec(D), row_spec(H)),
        compiler_params=pltpu.CompilerParams(
            dimension_semantics=("parallel",),   # megacore row sharding
        ),
        cost_estimate=pl.CostEstimate(
            flops=flops,
            transcendentals=3 * N * Hp,
            bytes_accessed=bytes_accessed,
        ),
    )(xf, hf, w_xg, w_hg, b_g, w_out, b_out)

    return y.reshape(B, S, D), h_new.reshape(B, S, H)


class TransitionRecurrentPallas:
    """Non-Markovian (recurrent) slot transition, non-relational."""

    def __init__(self, num_slots, slot_dim, hidden_dim, key):
        self.num_slots = num_slots
        self.slot_dim = slot_dim
        self.hidden_dim = hidden_dim
        D, H = slot_dim, hidden_dim
        Hp = _round_up(H, 128)      # per-gate lane-aligned slab width
        self.hidden_pad = Hp

        ks = jax.random.split(key, 7)
        s_in = 1.0 / jnp.sqrt(jnp.float32(D))
        s_h = 1.0 / jnp.sqrt(jnp.float32(H))

        w_ir = jax.random.normal(ks[0], (D, H), jnp.float32) * s_in
        w_iz = jax.random.normal(ks[1], (D, H), jnp.float32) * s_in
        w_in = jax.random.normal(ks[2], (D, H), jnp.float32) * s_in
        w_hr = jax.random.normal(ks[3], (H, H), jnp.float32) * s_h
        w_hz = jax.random.normal(ks[4], (H, H), jnp.float32) * s_h
        w_hn = jax.random.normal(ks[5], (H, H), jnp.float32) * s_h
        w_out = jax.random.normal(ks[6], (H, D), jnp.float32) * s_h

        def slabs(w_r, w_z, w_n, rows):
            out = jnp.zeros((rows, 3 * Hp), jnp.float32)
            out = out.at[:, 0:H].set(w_r)
            out = out.at[:, Hp:Hp + H].set(w_z)
            out = out.at[:, 2 * Hp:2 * Hp + H].set(w_n)
            return out

        # Fused gate parameters: r | z | n, each in its own 128-lane slab.
        self.w_xg = slabs(w_ir, w_iz, w_in, D).astype(jnp.bfloat16)   # [D,3Hp]
        self.w_hg = slabs(w_hr, w_hz, w_hn, H).astype(jnp.bfloat16)   # [H,3Hp]
        self.b_g = jnp.zeros((1, 3 * Hp), jnp.float32)
        self.w_out = w_out.astype(jnp.bfloat16)                       # [H,D]
        self.b_out = jnp.zeros((1, D), jnp.float32)

    def init_mem(self, batch_size):
        return jnp.zeros(
            (batch_size, self.num_slots, self.hidden_dim), jnp.float32
        )

    def __call__(self, x, mem=None):
        if mem is None:
            mem = self.init_mem(x.shape[0])
        params = (self.w_xg, self.w_hg, self.b_g, self.w_out, self.b_out)
        return _forward(x, mem, params)


def _reference(module, x, mem):
    """Pure-JAX reference of the same GRU transition (bf16 matmul / f32 math)."""
    B, S, D = x.shape
    H = module.hidden_dim
    Hp = module.hidden_pad
    bf16, f32 = jnp.bfloat16, jnp.float32

    xf = x.reshape(-1, D).astype(bf16)
    hf = mem.reshape(-1, H).astype(f32)
    gx = jnp.dot(xf, module.w_xg, preferred_element_type=f32)
    gh = jnp.dot(hf.astype(bf16), module.w_hg, preferred_element_type=f32)
    pre = gx + module.b_g
    r = jax.nn.sigmoid(pre[:, 0:Hp] + gh[:, 0:Hp])
    z = jax.nn.sigmoid(pre[:, Hp:2 * Hp] + gh[:, Hp:2 * Hp])
    n = jnp.tanh(pre[:, 2 * Hp:3 * Hp] + r * gh[:, 2 * Hp:3 * Hp])
    zl = z[:, :H]
    h_new = (1.0 - zl) * n[:, :H] + zl * hf
    y = jnp.dot(h_new.astype(bf16), module.w_out, preferred_element_type=f32)
    y = (y + module.b_out).astype(bf16)
    return y.reshape(B, S, D), h_new.reshape(B, S, H)


if __name__ == "__main__":
    key = jax.random.PRNGKey(0)
    k_param, k_x, k_mem = jax.random.split(key, 3)

    batch, num_slots, slot_dim, hidden_dim = 2, 4, 32, 32
    module = TransitionRecurrentPallas(num_slots, slot_dim, hidden_dim, k_param)

    x = jax.random.normal(k_x, (batch, num_slots, slot_dim), jnp.float32)
    mem = jax.random.normal(k_mem, (batch, num_slots, hidden_dim), jnp.float32)

    y, new_mem = module(x, mem)
    jax.block_until_ready((y, new_mem))

    y_ref, mem_ref = _reference(module, x, mem)
    jax.block_until_ready((y_ref, mem_ref))

    assert y.dtype == jnp.bfloat16 and new_mem.dtype == jnp.float32
    assert jnp.allclose(y.astype(jnp.float32), y_ref.astype(jnp.float32),
                        atol=2e-2, rtol=2e-2)
    assert jnp.allclose(new_mem, mem_ref, atol=2e-3, rtol=2e-3)

    print("KERNEL_OK")
</pallas_src>

<mosaic_0001>
module attributes {stable_mosaic.version = 11 : i64} {
  func.func @_transition_kernel(%arg0: i32, %arg1: memref<8x32xbf16, #tpu.memory_space<vmem>>, %arg2: memref<8x32xf32, #tpu.memory_space<vmem>>, %arg3: memref<32x384xbf16, #tpu.memory_space<vmem>>, %arg4: memref<32x384xbf16, #tpu.memory_space<vmem>>, %arg5: memref<1x384xf32, #tpu.memory_space<vmem>>, %arg6: memref<32x32xbf16, #tpu.memory_space<vmem>>, %arg7: memref<1x32xf32, #tpu.memory_space<vmem>>, %arg8: memref<8x32xbf16, #tpu.memory_space<vmem>>, %arg9: memref<8x32xf32, #tpu.memory_space<vmem>>) attributes {dimension_semantics = [#tpu.dimension_semantics<parallel>], iteration_bounds = array<i64: 1>, scalar_prefetch = 0 : i64, scratch_operands = 0 : i64, tpu.core_type = #tpu.core_type<tc>, window_params = [{transform_indices = @transform_0, window_bounds = array<i64: 8, 32>}, {transform_indices = @transform_1, window_bounds = array<i64: 8, 32>}, {pipeline_mode = #tpu.pipeline_mode<synchronous>, transform_indices = @transform_2, window_bounds = array<i64: 32, 384>}, {pipeline_mode = #tpu.pipeline_mode<synchronous>, transform_indices = @transform_3, window_bounds = array<i64: 32, 384>}, {pipeline_mode = #tpu.pipeline_mode<synchronous>, transform_indices = @transform_4, window_bounds = array<i64: 1, 384>}, {pipeline_mode = #tpu.pipeline_mode<synchronous>, transform_indices = @transform_5, window_bounds = array<i64: 32, 32>}, {pipeline_mode = #tpu.pipeline_mode<synchronous>, transform_indices = @transform_6, window_bounds = array<i64: 1, 32>}, {transform_indices = @transform_7, window_bounds = array<i64: 8, 32>}, {transform_indices = @transform_8, window_bounds = array<i64: 8, 32>}]} {
    %c0 = arith.constant 0 : index
    %c0_0 = arith.constant 0 : index
    %0 = vector.load %arg1[%c0, %c0_0] : memref<8x32xbf16, #tpu.memory_space<vmem>>, vector<8x32xbf16>
    %c0_1 = arith.constant 0 : index
    %c0_2 = arith.constant 0 : index
    %1 = vector.load %arg2[%c0_1, %c0_2] : memref<8x32xf32, #tpu.memory_space<vmem>>, vector<8x32xf32>
    %2 = arith.truncf %1 : vector<8x32xf32> to vector<8x32xbf16>
    %c0_3 = arith.constant 0 : index
    %c0_4 = arith.constant 0 : index
    %3 = vector.load %arg3[%c0_3, %c0_4] : memref<32x384xbf16, #tpu.memory_space<vmem>>, vector<32x384xbf16>
    %cst = arith.constant dense<0.000000e+00> : vector<8x384xf32>
    %4 = tpu.matmul %0, %3, %cst {dimension_numbers = #tpu.dot_dimension_numbers<[1], [0], [0], [1], [0, 0, 1, 1], [], []>} : vector<8x32xbf16>, vector<32x384xbf16>, vector<8x384xf32> -> vector<8x384xf32>
    %c0_5 = arith.constant 0 : index
    %c0_6 = arith.constant 0 : index
    %5 = vector.load %arg4[%c0_5, %c0_6] : memref<32x384xbf16, #tpu.memory_space<vmem>>, vector<32x384xbf16>
    %cst_7 = arith.constant dense<0.000000e+00> : vector<8x384xf32>
    %6 = tpu.matmul %2, %5, %cst_7 {dimension_numbers = #tpu.dot_dimension_numbers<[1], [0], [0], [1], [0, 0, 1, 1], [], []>} : vector<8x32xbf16>, vector<32x384xbf16>, vector<8x384xf32> -> vector<8x384xf32>
    %c0_8 = arith.constant 0 : index
    %c0_9 = arith.constant 0 : index
    %7 = vector.load %arg5[%c0_8, %c0_9] : memref<1x384xf32, #tpu.memory_space<vmem>>, vector<1x384xf32>
    %8 = vector.broadcast %7 : vector<1x384xf32> to vector<8x384xf32>
    %9 = arith.addf %4, %8 : vector<8x384xf32>
    %10 = vector.extract_strided_slice %9 {offsets = [0, 0], sizes = [8, 128], strides = [1, 1]} : vector<8x384xf32> to vector<8x128xf32>
    %11 = vector.extract_strided_slice %6 {offsets = [0, 0], sizes = [8, 128], strides = [1, 1]} : vector<8x384xf32> to vector<8x128xf32>
    %12 = arith.addf %10, %11 : vector<8x128xf32>
    %13 = arith.negf %12 : vector<8x128xf32>
    %14 = math.exp %13 : vector<8x128xf32>
    %cst_10 = arith.constant 1.000000e+00 : f32
    %15 = vector.broadcast %cst_10 : f32 to vector<8x128xf32>
    %16 = arith.addf %15, %14 : vector<8x128xf32>
    %17 = arith.divf %15, %16 : vector<8x128xf32>
    %18 = vector.extract_strided_slice %9 {offsets = [0, 128], sizes = [8, 128], strides = [1, 1]} : vector<8x384xf32> to vector<8x128xf32>
    %19 = vector.extract_strided_slice %6 {offsets = [0, 128], sizes = [8, 128], strides = [1, 1]} : vector<8x384xf32> to vector<8x128xf32>
    %20 = arith.addf %18, %19 : vector<8x128xf32>
    %21 = arith.negf %20 : vector<8x128xf32>
    %22 = math.exp %21 : vector<8x128xf32>
    %cst_11 = arith.constant 1.000000e+00 : f32
    %23 = vector.broadcast %cst_11 : f32 to vector<8x128xf32>
    %24 = arith.addf %23, %22 : vector<8x128xf32>
    %25 = arith.divf %23, %24 : vector<8x128xf32>
    %26 = vector.extract_strided_slice %9 {offsets = [0, 256], sizes = [8, 128], strides = [1, 1]} : vector<8x384xf32> to vector<8x128xf32>
    %27 = vector.extract_strided_slice %6 {offsets = [0, 256], sizes = [8, 128], strides = [1, 1]} : vector<8x384xf32> to vector<8x128xf32>
    %28 = arith.mulf %17, %27 : vector<8x128xf32>
    %29 = arith.addf %26, %28 : vector<8x128xf32>
    %30 = math.tanh %29 : vector<8x128xf32>
    %31 = vector.extract_strided_slice %25 {offsets = [0, 0], sizes = [8, 32], strides = [1, 1]} : vector<8x128xf32> to vector<8x32xf32>
    %cst_12 = arith.constant 1.000000e+00 : f32
    %32 = vector.broadcast %cst_12 : f32 to vector<8x32xf32>
    %33 = arith.subf %32, %31 : vector<8x32xf32>
    %34 = vector.extract_strided_slice %30 {offsets = [0, 0], sizes = [8, 32], strides = [1, 1]} : vector<8x128xf32> to vector<8x32xf32>
    %35 = arith.mulf %33, %34 : vector<8x32xf32>
    %36 = arith.mulf %31, %1 : vector<8x32xf32>
    %37 = arith.addf %35, %36 : vector<8x32xf32>
    %c0_13 = arith.constant 0 : index
    %c0_14 = arith.constant 0 : index
    %38 = vector.load %arg9[%c0_13, %c0_14] : memref<8x32xf32, #tpu.memory_space<vmem>>, vector<8x32xf32>
    tpu.vector_store %arg9[%c0_13, %c0_14], %37 {strides = array<i32>} : memref<8x32xf32, #tpu.memory_space<vmem>>, vector<8x32xf32>,
    %39 = arith.truncf %37 : vector<8x32xf32> to vector<8x32xbf16>
    %c0_15 = arith.constant 0 : index
    %c0_16 = arith.constant 0 : index
    %40 = vector.load %arg6[%c0_15, %c0_16] : memref<32x32xbf16, #tpu.memory_space<vmem>>, vector<32x32xbf16>
    %cst_17 = arith.constant dense<0.000000e+00> : vector<8x32xf32>
    %41 = tpu.matmul %39, %40, %cst_17 {dimension_numbers = #tpu.dot_dimension_numbers<[1], [0], [0], [1], [0, 0, 1, 1], [], []>} : vector<8x32xbf16>, vector<32x32xbf16>, vector<8x32xf32> -> vector<8x32xf32>
    %c0_18 = arith.constant 0 : index
    %c0_19 = arith.constant 0 : index
    %42 = vector.load %arg7[%c0_18, %c0_19] : memref<1x32xf32, #tpu.memory_space<vmem>>, vector<1x32xf32>
    %43 = vector.broadcast %42 : vector<1x32xf32> to vector<8x32xf32>
    %44 = arith.addf %41, %43 : vector<8x32xf32>
    %45 = arith.truncf %44 : vector<8x32xf32> to vector<8x32xbf16>
    %c0_20 = arith.constant 0 : index
    %c0_21 = arith.constant 0 : index
    %46 = vector.load %arg8[%c0_20, %c0_21] : memref<8x32xbf16, #tpu.memory_space<vmem>>, vector<8x32xbf16>
    tpu.vector_store %arg8[%c0_20, %c0_21], %45 {strides = array<i32>} : memref<8x32xbf16, #tpu.memory_space<vmem>>, vector<8x32xbf16>,
    return
  }
  func.func @transform_0(%arg0: i32) -> (i32, i32) {
    %c0_i32 = arith.constant 0 : i32
    %c0_i32_0 = arith.constant 0 : i32
    return %arg0, %c0_i32 : i32, i32
  }
  func.func @transform_1(%arg0: i32) -> (i32, i32) {
    %c0_i32 = arith.constant 0 : i32
    %c0_i32_0 = arith.constant 0 : i32
    return %arg0, %c0_i32 : i32, i32
  }
  func.func @transform_2(%arg0: i32) -> (i32, i32) {
    %c0_i32 = arith.constant 0 : i32
    %c0_i32_0 = arith.constant 0 : i32
    %c0_i32_1 = arith.constant 0 : i32
    return %c0_i32, %c0_i32_0 : i32, i32
  }
  func.func @transform_3(%arg0: i32) -> (i32, i32) {
    %c0_i32 = arith.constant 0 : i32
    %c0_i32_0 = arith.constant 0 : i32
    %c0_i32_1 = arith.constant 0 : i32
    return %c0_i32, %c0_i32_0 : i32, i32
  }
  func.func @transform_4(%arg0: i32) -> (i32, i32) {
    %c0_i32 = arith.constant 0 : i32
    %c0_i32_0 = arith.constant 0 : i32
    %c0_i32_1 = arith.constant 0 : i32
    return %c0_i32, %c0_i32_0 : i32, i32
  }
  func.func @transform_5(%arg0: i32) -> (i32, i32) {
    %c0_i32 = arith.constant 0 : i32
    %c0_i32_0 = arith.constant 0 : i32
    %c0_i32_1 = arith.constant 0 : i32
    return %c0_i32, %c0_i32_0 : i32, i32
  }
  func.func @transform_6(%arg0: i32) -> (i32, i32) {
    %c0_i32 = arith.constant 0 : i32
    %c0_i32_0 = arith.constant 0 : i32
    %c0_i32_1 = arith.constant 0 : i32
    return %c0_i32, %c0_i32_0 : i32, i32
  }
  func.func @transform_7(%arg0: i32) -> (i32, i32) {
    %c0_i32 = arith.constant 0 : i32
    %c0_i32_0 = arith.constant 0 : i32
    return %arg0, %c0_i32 : i32, i32
  }
  func.func @transform_8(%arg0: i32) -> (i32, i32) {
    %c0_i32 = arith.constant 0 : i32
    %c0_i32_0 = arith.constant 0 : i32
    return %arg0, %c0_i32 : i32, i32
  }
}

</mosaic_0001>

<llo_original>
// kernel: _forward.1
$region0: #{_forward.1}
  #allocation0 [shape = 'u32[]', space=smem, size = 0x4, offset = 0x4, fixed_abs, tag = 'smem constant byte address 0x4 - core index']
  #allocation1 [shape = 'u32[144,128]{1,0:T(1,128)}', space=vmem, size = 0x12000, scoped, tag = 'internal scratch']
  %s0 = inlined_call_operand.vmem [shape: bf16[8,32], index: 0, kind: input, shape index: {}]
  %s1 = inlined_call_operand.vmem [shape: f32[8,32], index: 1, kind: input, shape index: {}]
  %s2 = inlined_call_operand.hbm [shape: bf16[32,384], index: 2, kind: input, shape index: {}]
  %s3 = inlined_call_operand.hbm [shape: bf16[32,384], index: 3, kind: input, shape index: {}]
  %s4 = inlined_call_operand.hbm [shape: f32[1,384], index: 4, kind: input, shape index: {}]
  %s5 = inlined_call_operand.vmem [shape: bf16[32,32], index: 5, kind: input, shape index: {}]
  %s6 = inlined_call_operand.vmem [shape: f32[1,32], index: 6, kind: input, shape index: {}]
  %s7 = inlined_call_operand.hbm [shape: bf16[8,32], index: 7, kind: output, shape index: {0}]
  %s8 = inlined_call_operand.hbm [shape: f32[8,32], index: 8, kind: output, shape index: {1}]
  %9 = xla_tuple %s7, %s8
  %s10 = sld [smem:[#allocation0]]
  $region58: #{_forward.1} parent=0
    _
  %s12 = ssub.s32 1, %s10
  %s13 = scalar_select 0, %s12, %s10
  $region1: #{_forward.1} parent=0
    #allocation2 [shape = 'u8[24576]{0}', space=vmem, size = 0x6000, scoped, tag = 'input window, operand 2, single buffered']
    #allocation3 [shape = 's32[1]{0}', space=sflag, size = 0x4, scoped, tag = 'scoped memory for _forward.1']
    #allocation4 [shape = 's32[1]{0}', space=sflag, size = 0x4, scoped, tag = 'scoped memory for _forward.1']
    #allocation5 [shape = 'u8[24576]{0}', space=vmem, size = 0x6000, scoped, tag = 'input window, operand 3, single buffered']
    #allocation6 [shape = 's32[1]{0}', space=sflag, size = 0x4, scoped, tag = 'scoped memory for _forward.1']
    #allocation7 [shape = 'u8[1536]{0}', space=vmem, size = 0x800, scoped, tag = 'input window, operand 4, single buffered']
    #allocation8 [shape = 'u8[2048]{0}', space=vmem, size = 0x800, scoped, tag = 'output window, operand 0, single buffered']
    #allocation9 [shape = 'u8[4096]{0}', space=vmem, size = 0x1000, scoped, tag = 'output window, operand 1, single buffered']
    #allocation10 [shape = 's32[1]{0}', space=sflag, size = 0x4, scoped, tag = 'scoped memory for _forward.1']
    %14 = vsyncpa [#allocation3], 0
    %15 = vsyncpa [#allocation6], 0
    %16 = vsyncpa [#allocation4], 0
    %17 = vsyncpa [#allocation10], 0
    // Predicated region
    $region2: #{_forward.1} parent=1 // pred_check
      _
    $region3: #{_forward.1} parent=1 // pred_check_branch
      %19 = sbr.rel (0) target = $region5
    $region4: #{_forward.1} parent=1 // pred_region
      _
    $region5: #{_forward.1} parent=1 // pred_fallthru
      _
    // Predicated region
    $region6: #{_forward.1} parent=1 // pred_check
      _
    $region7: #{_forward.1} parent=1 // pred_check_branch
      %21 = sbr.rel (0) target = $region9
    $region8: #{_forward.1} parent=1 // pred_region
      _
    $region9: #{_forward.1} parent=1 // pred_fallthru
      _
    // Predicated region
    $region10: #{_forward.1} parent=1 // pred_check
      _
    $region11: #{_forward.1} parent=1 // pred_check_branch
      %23 = sbr.rel (0) target = $region13
    $region12: #{_forward.1} parent=1 // pred_region
      %s25 = ssub.s32 768, 768
      %26 = vsyncadd [#allocation3], %s25
      %s27 = sshll.u32 [#allocation2], 4
      %s28 = int_to_ptr.vmem [resolvable:$true] %s27
      %33 = dma.hbm_to_vmem [thread:$0]  %s2, 768, %s28, [#allocation3], 192, 192, 12
    $region13: #{_forward.1} parent=1 // pred_fallthru
      _
    // Predicated region
    $region14: #{_forward.1} parent=1 // pred_check
      _
    $region15: #{_forward.1} parent=1 // pred_check_branch
      %35 = sbr.rel (0) target = $region17
    $region16: #{_forward.1} parent=1 // pred_region
      %s37 = ssub.s32 768, 768
      %38 = vsyncadd [#allocation6], %s37
      %s39 = sshll.u32 [#allocation5], 4
      %s40 = int_to_ptr.vmem [resolvable:$true] %s39
      %45 = dma.hbm_to_vmem [thread:$0]  %s3, 768, %s40, [#allocation6], 192, 192, 12
    $region17: #{_forward.1} parent=1 // pred_fallthru
      _
    // Predicated region
    $region18: #{_forward.1} parent=1 // pred_check
      _
    $region19: #{_forward.1} parent=1 // pred_check_branch
      %47 = sbr.rel (0) target = $region21
    $region20: #{_forward.1} parent=1 // pred_region
      %s49 = ssub.s32 48, 48
      %50 = vsyncadd [#allocation6], %s49
      %s52 = sshll.u32 [#allocation7], 4
      %s53 = int_to_ptr.vmem [resolvable:$true] %s52
      %55 = dma.hbm_to_vmem [thread:$0]  %s4, 48, %s53, [#allocation6]
    $region21: #{_forward.1} parent=1 // pred_fallthru
      _
    // Predicated region
    $region22: #{_forward.1} parent=1 // pred_check
      _
    $region23: #{_forward.1} parent=1 // pred_check_branch
      %57 = sbr.rel (0) target = $region25
    $region24: #{_forward.1} parent=1 // pred_region
      _
    $region25: #{_forward.1} parent=1 // pred_fallthru
      _
    // Predicated region
    $region26: #{_forward.1} parent=1 // pred_check
      _
    $region27: #{_forward.1} parent=1 // pred_check_branch
      %59 = sbr.rel (0) target = $region29
    $region28: #{_forward.1} parent=1 // pred_region
      _
    $region29: #{_forward.1} parent=1 // pred_fallthru
      _
    // Predicated region
    $region30: #{_forward.1} parent=1 // pred_check
      _
    $region31: #{_forward.1} parent=1 // pred_check_branch
      %61 = sbr.rel (0) target = $region33
    $region32: #{_forward.1} parent=1 // pred_region
      %62 = dma.done [#allocation3], 768
    $region33: #{_forward.1} parent=1 // pred_fallthru
      _
    // Predicated region
    $region34: #{_forward.1} parent=1 // pred_check
      _
    $region35: #{_forward.1} parent=1 // pred_check_branch
      %64 = sbr.rel (0) target = $region37
    $region36: #{_forward.1} parent=1 // pred_region
      %65 = dma.done [#allocation6], 768
    $region37: #{_forward.1} parent=1 // pred_fallthru
      _
    // Predicated region
    $region38: #{_forward.1} parent=1 // pred_check
      _
    $region39: #{_forward.1} parent=1 // pred_check_branch
      %67 = sbr.rel (0) target = $region41
    $region40: #{_forward.1} parent=1 // pred_region
      %68 = dma.done [#allocation6], 48
    $region41: #{_forward.1} parent=1 // pred_fallthru
      _
    %v70 = vld [vmem:[%s0] sm:$0xf]
    %v71 = vld [vmem:[%s1] sm:$0xff]
    %v72 = vpack.c.bf16 %v71, %v71
    %v73 = vld [vmem:[#allocation2] sm:$0xff]
    %v74 = vld [vmem:[#allocation2 + $0x8] sm:$0xf]
    %v75 = vld [vmem:[#allocation2 + $0xc] sm:$0xff]
    %v76 = vld [vmem:[#allocation2 + $0x14] sm:$0xf]
    %v77 = vld [vmem:[#allocation2 + $0x18] sm:$0xff]
    %v78 = vld [vmem:[#allocation2 + $0x20] sm:$0xf]
    %v79 = vld [vmem:[#allocation2 + $0x24] sm:$0xff]
    %v80 = vld [vmem:[#allocation2 + $0x2c] sm:$0xf]
    %v81 = vld [vmem:[#allocation5] sm:$0xff]
    %v82 = vld [vmem:[#allocation5 + $0x8] sm:$0xf]
    %v83 = vld [vmem:[#allocation5 + $0xc] sm:$0xff]
    %v84 = vld [vmem:[#allocation5 + $0x14] sm:$0xf]
    %v85 = vld [vmem:[#allocation5 + $0x18] sm:$0xff]
    %v86 = vld [vmem:[#allocation5 + $0x20] sm:$0xf]
    %v87 = vld [vmem:[#allocation5 + $0x24] sm:$0xff]
    %v88 = vld [vmem:[#allocation5 + $0x2c] sm:$0xf]
    %v97 = vunpack.c.l.b16 %v81
    %v98 = vunpack.c.h.b16 %v81
    %v99 = vunpack.c.l.b16 %v82
    %v100 = vunpack.c.l.b16 %v83
    %v101 = vunpack.c.h.b16 %v83
    %v102 = vunpack.c.l.b16 %v84
    %v103 = vunpack.c.l.b16 %v85
    %v104 = vunpack.c.h.b16 %v85
    %v105 = vunpack.c.l.b16 %v86
    %v106 = vunpack.c.l.b16 %v87
    %v107 = vunpack.c.h.b16 %v87
    %v108 = vunpack.c.l.b16 %v88
    %v109 = vpack.c.b16 %v100, %v97
    %v110 = vpack.c.b16 %v101, %v98
    %v111 = vpack.c.b16 %v102, %v99
    %v112 = vpack.c.b16 %v106, %v103
    %v113 = vpack.c.b16 %v107, %v104
    %v114 = vpack.c.b16 %v108, %v105
    %vm121 = vcmask 261120
    %v123 = vsel %vm121, %v72, 0
    %125 = vmatprep.subr.bf16.mxu0 0
    %126 = vmatpush1.bf16.msra.mxu0 0
    %127 = vmatprep.subr.bf16.mxu0 0
    %128 = vmatpush1.bf16.msra.mxu0 0
    %129 = vmatprep.subr.bf16.mxu0 0
    %130 = vmatpush1.bf16.msra.mxu0 0
    %131 = vmatprep.subr.bf16.mxu0 0
    %132 = vmatpush1.bf16.msra.mxu0 0
    %133 = vmatprep.subr.bf16.mxu0 0
    %134 = vmatpush1.bf16.msra.mxu0 0
    %135 = vmatprep.subr.bf16.mxu0 0
    %136 = vmatpush1.bf16.msra.mxu0 0
    %137 = vmatprep.subr.bf16.mxu0 %v113
    %138 = vmatpush1.bf16.msra.mxu0 %v112
    %139 = vmatprep.subr.bf16.mxu0 %v110
    %140 = vmatpush1.bf16.msra.mxu0 %v109
    %141 = vmatprep.subr.bf16.mxu0 0
    %142 = vmatpush2.bf16.msra.mxu0 0
    %143 = vmatprep.subr.bf16.mxu0 0
    %144 = vmatpush2.bf16.msra.mxu0 0
    %145 = vmatprep.subr.bf16.mxu0 0
    %146 = vmatpush2.bf16.msra.mxu0 0
    %147 = vmatprep.subr.bf16.mxu0 0
    %148 = vmatpush2.bf16.msra.mxu0 0
    %149 = vmatprep.subr.bf16.mxu0 0
    %150 = vmatpush2.bf16.msra.mxu0 0
    %151 = vmatprep.subr.bf16.mxu0 0
    %152 = vmatpush2.bf16.msra.mxu0 0
    %153 = vmatprep.subr.bf16.mxu0 0
    %154 = vmatpush2.bf16.msra.mxu0 0
    %155 = vmatprep.subr.bf16.mxu0 0
    %156 = vmatpush2.bf16.msra.mxu0 0
    %157 = vmatprep.mubr.bf16.mxu0 0
    %158 = vmatmul.mubr.bf16.gmra.mxu0 %v123
    %v159 = vpop.f32.mrf.mxu0
    %v160 = vadd.f32 0.0, %v159
    %v161 = vpop.f32.mrf.mxu0
    %v162 = vadd.f32 0.0, %v161
    %v163 = vpop.f32.mrf.mxu0
    %v164 = vpop.f32.mrf.mxu0
    %165 = vdwg.mxu0
    %166 = vmatprep.subr.bf16.mxu0 0
    %167 = vmatpush1.bf16.msra.mxu0 0
    %168 = vmatprep.subr.bf16.mxu0 0
    %169 = vmatpush1.bf16.msra.mxu0 0
    %170 = vmatprep.subr.bf16.mxu0 0
    %171 = vmatpush1.bf16.msra.mxu0 0
    %172 = vmatprep.subr.bf16.mxu0 0
    %173 = vmatpush1.bf16.msra.mxu0 0
    %174 = vmatprep.subr.bf16.mxu0 0
    %175 = vmatpush1.bf16.msra.mxu0 0
    %176 = vmatprep.subr.bf16.mxu0 0
    %177 = vmatpush1.bf16.msra.mxu0 0
    %178 = vmatprep.subr.bf16.mxu0 0
    %179 = vmatpush1.bf16.msra.mxu0 %v114
    %180 = vmatprep.subr.bf16.mxu0 0
    %181 = vmatpush1.bf16.msra.mxu0 %v111
    %182 = vmatprep.subr.bf16.mxu0 0
    %183 = vmatpush2.bf16.msra.mxu0 0
    %184 = vmatprep.subr.bf16.mxu0 0
    %185 = vmatpush2.bf16.msra.mxu0 0
    %186 = vmatprep.subr.bf16.mxu0 0
    %187 = vmatpush2.bf16.msra.mxu0 0
    %188 = vmatprep.subr.bf16.mxu0 0
    %189 = vmatpush2.bf16.msra.mxu0 0
    %190 = vmatprep.subr.bf16.mxu0 0
    %191 = vmatpush2.bf16.msra.mxu0 0
    %192 = vmatprep.subr.bf16.mxu0 0
    %193 = vmatpush2.bf16.msra.mxu0 0
    %194 = vmatprep.subr.bf16.mxu0 0
    %195 = vmatpush2.bf16.msra.mxu0 0
    %196 = vmatprep.subr.bf16.mxu0 0
    %197 = vmatpush2.bf16.msra.mxu0 0
    %198 = vmatprep.mubr.bf16.mxu0 0
    %199 = vmatmul.mubr.bf16.gmra.mxu0 %v123
    %v200 = vpop.f32.mrf.mxu0
    %v201 = vadd.f32 0.0, %v200
    %v202 = vpop.f32.mrf.mxu0
    %v203 = vpop.f32.mrf.mxu0
    %v204 = vpop.f32.mrf.mxu0
    %205 = vdwg.mxu0
    %v206 = vld [vmem:[#allocation7] sm:$0x7]
    %v208 = vlaneseq
    %v209 = vshrl.u32 %v208, 7
    %v210 = vsub.s32 0, %v209
    %v211 = vrot.slane %v206, %v210
    %v212 = vlaneseq
    %v213 = vshrl.u32 %v212, 7
    %v214 = vsub.s32 1, %v213
    %v215 = vrot.slane %v206, %v214
    %v216 = vlaneseq
    %v217 = vshrl.u32 %v216, 7
    %v218 = vsub.s32 2, %v217
    %v219 = vrot.slane %v206, %v218
    %v231 = vunpack.c.l.b16 %v73
    %v232 = vunpack.c.h.b16 %v73
    %v233 = vunpack.c.l.b16 %v74
    %v234 = vunpack.c.l.b16 %v75
    %v235 = vunpack.c.h.b16 %v75
    %v236 = vunpack.c.l.b16 %v76
    %v237 = vunpack.c.l.b16 %v77
    %v238 = vunpack.c.h.b16 %v77
    %v239 = vunpack.c.l.b16 %v78
    %v240 = vunpack.c.l.b16 %v79
    %v241 = vunpack.c.h.b16 %v79
    %v242 = vunpack.c.l.b16 %v80
    %v243 = vpack.c.b16 %v234, %v231
    %v244 = vpack.c.b16 %v235, %v232
    %v245 = vpack.c.b16 %v236, %v233
    %v246 = vpack.c.b16 %v240, %v237
    %v247 = vpack.c.b16 %v241, %v238
    %v248 = vpack.c.b16 %v242, %v239
    %v256 = vsel %vm121, %v70, 0
    %258 = vmatprep.subr.bf16.mxu0 0
    %259 = vmatpush1.bf16.msra.mxu0 0
    %260 = vmatprep.subr.bf16.mxu0 0
    %261 = vmatpush1.bf16.msra.mxu0 0
    %262 = vmatprep.subr.bf16.mxu0 0
    %263 = vmatpush1.bf16.msra.mxu0 0
    %264 = vmatprep.subr.bf16.mxu0 0
    %265 = vmatpush1.bf16.msra.mxu0 0
    %266 = vmatprep.subr.bf16.mxu0 0
    %267 = vmatpush1.bf16.msra.mxu0 0
    %268 = vmatprep.subr.bf16.mxu0 0
    %269 = vmatpush1.bf16.msra.mxu0 0
    %270 = vmatprep.subr.bf16.mxu0 %v247
    %271 = vmatpush1.bf16.msra.mxu0 %v246
    %272 = vmatprep.subr.bf16.mxu0 %v244
    %273 = vmatpush1.bf16.msra.mxu0 %v243
    %274 = vmatprep.subr.bf16.mxu0 0
    %275 = vmatpush2.bf16.msra.mxu0 0
    %276 = vmatprep.subr.bf16.mxu0 0
    %277 = vmatpush2.bf16.msra.mxu0 0
    %278 = vmatprep.subr.bf16.mxu0 0
    %279 = vmatpush2.bf16.msra.mxu0 0
    %280 = vmatprep.subr.bf16.mxu0 0
    %281 = vmatpush2.bf16.msra.mxu0 0
    %282 = vmatprep.subr.bf16.mxu0 0
    %283 = vmatpush2.bf16.msra.mxu0 0
    %284 = vmatprep.subr.bf16.mxu0 0
    %285 = vmatpush2.bf16.msra.mxu0 0
    %286 = vmatprep.subr.bf16.mxu0 0
    %287 = vmatpush2.bf16.msra.mxu0 0
    %288 = vmatprep.subr.bf16.mxu0 0
    %289 = vmatpush2.bf16.msra.mxu0 0
    %290 = vmatprep.mubr.bf16.mxu0 0
    %291 = vmatmul.mubr.bf16.gmra.mxu0 %v256
    %v292 = vpop.f32.mrf.mxu0
    %v293 = vadd.f32 %v211, %v292
    %v294 = vpop.f32.mrf.mxu0
    %v295 = vadd.f32 %v215, %v294
    %v296 = vpop.f32.mrf.mxu0
    %v297 = vpop.f32.mrf.mxu0
    %298 = vdwg.mxu0
    %299 = vmatprep.subr.bf16.mxu0 0
    %300 = vmatpush1.bf16.msra.mxu0 0
    %301 = vmatprep.subr.bf16.mxu0 0
    %302 = vmatpush1.bf16.msra.mxu0 0
    %303 = vmatprep.subr.bf16.mxu0 0
    %304 = vmatpush1.bf16.msra.mxu0 0
    %305 = vmatprep.subr.bf16.mxu0 0
    %306 = vmatpush1.bf16.msra.mxu0 0
    %307 = vmatprep.subr.bf16.mxu0 0
    %308 = vmatpush1.bf16.msra.mxu0 0
    %309 = vmatprep.subr.bf16.mxu0 0
    %310 = vmatpush1.bf16.msra.mxu0 0
    %311 = vmatprep.subr.bf16.mxu0 0
    %312 = vmatpush1.bf16.msra.mxu0 %v248
    %313 = vmatprep.subr.bf16.mxu0 0
    %314 = vmatpush1.bf16.msra.mxu0 %v245
    %315 = vmatprep.subr.bf16.mxu0 0
    %316 = vmatpush2.bf16.msra.mxu0 0
    %317 = vmatprep.subr.bf16.mxu0 0
    %318 = vmatpush2.bf16.msra.mxu0 0
    %319 = vmatprep.subr.bf16.mxu0 0
    %320 = vmatpush2.bf16.msra.mxu0 0
    %321 = vmatprep.subr.bf16.mxu0 0
    %322 = vmatpush2.bf16.msra.mxu0 0
    %323 = vmatprep.subr.bf16.mxu0 0
    %324 = vmatpush2.bf16.msra.mxu0 0
    %325 = vmatprep.subr.bf16.mxu0 0
    %326 = vmatpush2.bf16.msra.mxu0 0
    %327 = vmatprep.subr.bf16.mxu0 0
    %328 = vmatpush2.bf16.msra.mxu0 0
    %329 = vmatprep.subr.bf16.mxu0 0
    %330 = vmatpush2.bf16.msra.mxu0 0
    %331 = vmatprep.mubr.bf16.mxu0 0
    %332 = vmatmul.mubr.bf16.gmra.mxu0 %v256
    %v333 = vpop.f32.mrf.mxu0
    %v334 = vadd.f32 %v219, %v333
    %v335 = vpop.f32.mrf.mxu0
    %v336 = vpop.f32.mrf.mxu0
    %v337 = vpop.f32.mrf.mxu0
    %338 = vdwg.mxu0
    %v339 = vadd.f32 %v293, %v160
    %v340 = vxor.u32 %v339, 2147483648
    %v341 = vmul.f32 %v340, 1.442695
    %v342 = vpow.pop %v341
    %v343 = vadd.f32 %v342, 1.0
    %v344 = vrcp.pop %v343
    %v345 = vmul.f32 1.0, %v344
    %v346 = vadd.f32 %v295, %v162
    %v347 = vxor.u32 %v346, 2147483648
    %v348 = vmul.f32 %v347, 1.442695
    %v349 = vpow.pop %v348
    %v350 = vadd.f32 %v349, 1.0
    %v351 = vrcp.pop %v350
    %v352 = vmul.f32 1.0, %v351
    %v353 = vmul.f32 %v345, %v201
    %v354 = vadd.f32 %v334, %v353
    %v355 = vtanh.pop %v354
    %v356 = vsub.f32 1.0, %v352
    %v357 = vmul.f32 %v356, %v355
    %v358 = vmul.f32 %v352, %v71
    %v359 = vadd.f32 %v357, %v358
    %360 = vst.msk [vmem:[#allocation9] sm:$0xff] %vm121, %v359
    %v361 = vpack.c.bf16 %v359, %v359
    %v362 = vld [vmem:[%s5] sm:$0xf]
    %v363 = vld [vmem:[%s5 + $0x4] sm:$0xf]
    %v364 = vld [vmem:[%s5 + $0x8] sm:$0xf]
    %v365 = vld [vmem:[%s5 + $0xc] sm:$0xf]
    %v366 = vld [vmem:[%s6] sm:$0x1]
    %v368 = vlaneseq
    %v369 = vshrl.u32 %v368, 7
    %v370 = vsub.s32 0, %v369
    %v371 = vrot.slane %v366, %v370
    %v377 = vunpack.c.l.b16 %v362
    %v378 = vunpack.c.l.b16 %v363
    %v379 = vunpack.c.l.b16 %v364
    %v380 = vunpack.c.l.b16 %v365
    %v381 = vpack.c.b16 %v378, %v377
    %v382 = vpack.c.b16 %v380, %v379
    %v386 = vsel %vm121, %v361, 0
    %388 = vmatprep.subr.bf16.mxu0 0
    %389 = vmatpush1.bf16.msra.mxu0 0
    %390 = vmatprep.subr.bf16.mxu0 0
    %391 = vmatpush1.bf16.msra.mxu0 0
    %392 = vmatprep.subr.bf16.mxu0 0
    %393 = vmatpush1.bf16.msra.mxu0 0
    %394 = vmatprep.subr.bf16.mxu0 0
    %395 = vmatpush1.bf16.msra.mxu0 0
    %396 = vmatprep.subr.bf16.mxu0 0
    %397 = vmatpush1.bf16.msra.mxu0 0
    %398 = vmatprep.subr.bf16.mxu0 0
    %399 = vmatpush1.bf16.msra.mxu0 0
    %400 = vmatprep.subr.bf16.mxu0 0
    %401 = vmatpush1.bf16.msra.mxu0 %v382
    %402 = vmatprep.subr.bf16.mxu0 0
    %403 = vmatpush1.bf16.msra.mxu0 %v381
    %404 = vmatprep.subr.bf16.mxu0 0
    %405 = vmatpush2.bf16.msra.mxu0 0
    %406 = vmatprep.subr.bf16.mxu0 0
    %407 = vmatpush2.bf16.msra.mxu0 0
    %408 = vmatprep.subr.bf16.mxu0 0
    %409 = vmatpush2.bf16.msra.mxu0 0
    %410 = vmatprep.subr.bf16.mxu0 0
    %411 = vmatpush2.bf16.msra.mxu0 0
    %412 = vmatprep.subr.bf16.mxu0 0
    %413 = vmatpush2.bf16.msra.mxu0 0
    %414 = vmatprep.subr.bf16.mxu0 0
    %415 = vmatpush2.bf16.msra.mxu0 0
    %416 = vmatprep.subr.bf16.mxu0 0
    %417 = vmatpush2.bf16.msra.mxu0 0
    %418 = vmatprep.subr.bf16.mxu0 0
    %419 = vmatpush2.bf16.msra.mxu0 0
    %420 = vmatprep.mubr.bf16.mxu0 0
    %421 = vmatmul.mubr.bf16.gmra.mxu0 %v386
    %v422 = vpop.f32.mrf.mxu0
    %v423 = vadd.f32 %v371, %v422
    %v424 = vpop.f32.mrf.mxu0
    %v425 = vpop.f32.mrf.mxu0
    %v426 = vpop.f32.mrf.mxu0
    %427 = vdwg.mxu0
    %v428 = vpack.c.bf16 %v423, %v423
    %vm429 = vcmask 257024
    %430 = vst.msk [vmem:[#allocation8] sm:$0xf] %vm429, %v428
    // Predicated region
    $region42: #{_forward.1} parent=1 // pred_check
      _
    $region43: #{_forward.1} parent=1 // pred_check_branch
      %432 = sbr.rel (0) target = $region45
    $region44: #{_forward.1} parent=1 // pred_region
      %s434 = ssub.s32 64, 64
      %435 = vsyncadd [#allocation4], %s434
      %s437 = sshll.u32 [#allocation8], 4
      %s438 = int_to_ptr.vmem [resolvable:$true] %s437
      %440 = dma.vmem_to_hbm [thread:$0]  %s438, 64, %s7, [#allocation4]
    $region45: #{_forward.1} parent=1 // pred_fallthru
      _
    // Predicated region
    $region46: #{_forward.1} parent=1 // pred_check
      _
    $region47: #{_forward.1} parent=1 // pred_check_branch
      %442 = sbr.rel (0) target = $region49
    $region48: #{_forward.1} parent=1 // pred_region
      %s444 = ssub.s32 128, 128
      %445 = vsyncadd [#allocation10], %s444
      %s447 = sshll.u32 [#allocation9], 4
      %s448 = int_to_ptr.vmem [resolvable:$true] %s447
      %450 = dma.vmem_to_hbm [thread:$0]  %s448, 128, %s8, [#allocation10]
    $region49: #{_forward.1} parent=1 // pred_fallthru
      _
    // Predicated region
    $region50: #{_forward.1} parent=1 // pred_check
      _
    $region51: #{_forward.1} parent=1 // pred_check_branch
      %452 = sbr.rel (0) target = $region53
    $region52: #{_forward.1} parent=1 // pred_region
      %453 = dma.done [#allocation4], 64
    $region53: #{_forward.1} parent=1 // pred_fallthru
      _
    // Predicated region
    $region54: #{_forward.1} parent=1 // pred_check
      _
    $region55: #{_forward.1} parent=1 // pred_check_branch
      %455 = sbr.rel (0) target = $region57
    $region56: #{_forward.1} parent=1 // pred_region
      %456 = dma.done [#allocation10], 128
    $region57: #{_forward.1} parent=1 // pred_fallthru
      _
    %457 = vsyncpa [#allocation3], 1
    %458 = vsyncpa [#allocation6], 1
    %459 = vsyncpa [#allocation4], 1
    %460 = vsyncpa [#allocation10], 1

</llo_original>
